<compile_context>
chip_gen: v7x
topology: tpu7x:2x2x1
jax: 0.10.0
libtpu: 0.0.40
codegen_flags: <defaults>
</compile_context>

<pallas_src>
import functools

import jax
import jax.numpy as jnp
from jax import lax
from jax.experimental import pallas as pl
from jax.experimental.pallas import tpu as pltpu

_EPS = 1e-12                      # torch.nn.functional.normalize default eps
_VMEM_HEADROOM = 2 * 1024 * 1024  # leave room for Mosaic internals
_MAX_TILE_M = 512                 # ~85% of HBM roofline at 512-row tiles


def _round_up(v: int, m: int) -> int:
    return (v + m - 1) // m * m


def _cdiv(a: int, b: int) -> int:
    return (a + b - 1) // b


@functools.lru_cache(maxsize=None)
def _vmem_budget_bytes() -> int:
    """~75% of this generation's physical VMEM (96 MiB v5e/v6e, 48 MiB v7x)."""
    try:
        cap = int(pltpu.get_tpu_info().vmem_capacity_bytes)
    except Exception:            # no TPU info available -> conservative default
        cap = 64 * 1024 * 1024
    return max(int(cap * 0.75), 16 * 1024 * 1024)


# ----------------------------------------------------------------------------
# Kernel: one (tile_m, tile_n) output tile per grid step.
#   out = normalize(x, rows) @ wn
# wn already has unit-norm columns (hoisted to the wrapper).  Row
# normalization is fused as a single rsqrt (EUP) plus one broadcast multiply,
# applied to whichever operand is narrower (x when tile_n >= D, the output
# tile otherwise).  Mathematically identical to normalizing x rows first:
# diagonal scaling commutes with the matmul, max(norm,eps)==sqrt(max(ss,eps^2)).
# ----------------------------------------------------------------------------
def _normed_linear_kernel(x_ref, wn_ref, o_ref, *, scale_x):
    x = x_ref[...]                                          # (tile_m, D)
    xf = x.astype(jnp.float32)
    row_ss = jnp.sum(xf * xf, axis=1, keepdims=True)        # (tile_m, 1)
    inv_row = lax.rsqrt(jnp.maximum(row_ss, jnp.float32(_EPS * _EPS)))
    if scale_x:
        xs = (xf * inv_row).astype(x_ref.dtype)
        o_ref[...] = jnp.dot(xs, wn_ref[...],
                             preferred_element_type=jnp.float32)
    else:
        s = jnp.dot(x, wn_ref[...], preferred_element_type=jnp.float32)
        o_ref[...] = s * inv_row


# ----------------------------------------------------------------------------
# Tile planner.
# ----------------------------------------------------------------------------
def _plan_tiles(n, d, c, x_isz, w_isz, budget, tile_m=None, tile_n=None):
    """Returns (tile_m, tile_n, n_pad, c_pad, num_i, num_j, single_buffer_w)."""
    avail = max(budget - _VMEM_HEADROOM, 4 * 1024 * 1024)
    c_pad = max(128, _round_up(c, 128))        # lane-dense output

    # ---- class-dim tiling --------------------------------------------------
    if tile_n is None:
        if d * c_pad * w_isz <= avail // 2:
            tile_n = c_pad                     # whole weight resident
        else:
            tile_n = 128
            for cand in (2048, 1024, 512, 256):
                if d * cand * w_isz * 2 <= avail // 2:
                    tile_n = cand
                    break
    tile_n = min(max(128, _round_up(tile_n, 128)), c_pad)
    c_pad = _round_up(c_pad, tile_n)
    num_j = c_pad // tile_n
    single_buffer_w = (num_j == 1)             # constant index_map -> 1 buffer
    w_bytes = d * tile_n * w_isz * (1 if single_buffer_w else 2)

    # ---- row tiling (balanced, minimal tail padding) ------------------------
    row_mult = 16 if x_isz < 4 else 8          # bf16 sublane packing
    if tile_m is None:
        per_row = 2 * (d * x_isz + tile_n * 4)     # double-buffered x + out
        fit_rows = max(avail - w_bytes, 0) // per_row
        tile_m_max = max(row_mult,
                         min(_MAX_TILE_M, fit_rows // row_mult * row_mult))
        num_i = max(1, _cdiv(max(n, 1), tile_m_max))
        if n > row_mult and num_i < 2:
            num_i = 2                           # feed both TensorCores on v7x
        tile_m = _round_up(_cdiv(max(n, 1), num_i), row_mult)
    else:
        tile_m = max(row_mult, _round_up(tile_m, row_mult))
        num_i = max(1, _cdiv(max(n, 1), tile_m))
    n_pad = tile_m * num_i
    # TODO(synk): if a single (row_mult, D) x tile + (D, 128) weight tile still
    # exceeds the budget (enormous D), a K-tiled variant with a VMEM
    # accumulator would be needed.
    return tile_m, tile_n, n_pad, c_pad, num_i, num_j, single_buffer_w


# ----------------------------------------------------------------------------
# Wrapper.
# ----------------------------------------------------------------------------
def normed_linear(x: jax.Array, weight: jax.Array, *,
                  use_bf16_matmul: bool = True,
                  tile_m: int | None = None,
                  tile_n: int | None = None) -> jax.Array:
    """x: [N, D], weight: [D, C] -> [N, C] float32 cosine-similarity logits."""
    N, D = x.shape
    D2, C = weight.shape
    assert D == D2, (D, D2)

    compute_dtype = jnp.bfloat16 if use_bf16_matmul else jnp.float32
    x_isz = jnp.dtype(compute_dtype).itemsize
    w_isz = x_isz

    budget = _vmem_budget_bytes()
    tile_m, tile_n, N_pad, C_pad, num_i, num_j, single_w = _plan_tiles(
        N, D, C, x_isz, w_isz, budget, tile_m=tile_m, tile_n=tile_n)

    # Hoisted weight-column normalization (done once, not per row tile):
    # wn = w * rsqrt(max(sum(w*w, axis=0), eps^2)) == w / max(||w||_col, eps)
    w32 = weight.astype(jnp.float32)
    col_ss = jnp.sum(w32 * w32, axis=0, keepdims=True)
    wn = (w32 * lax.rsqrt(jnp.maximum(col_ss, _EPS * _EPS))).astype(compute_dtype)
    if C_pad != C:
        wn = jnp.pad(wn, ((0, 0), (0, C_pad - C)))     # zero cols -> zero logits

    # Stream x at the MXU compute dtype (bf16 path halves x DMA + VMEM).
    # Note: in the bf16 path row_ss is computed from bf16-rounded x, so the
    # result matches "normalize bf16 x then matmul" (within bf16 tolerance).
    x_in = x.astype(compute_dtype)
    if N_pad != N:
        x_in = jnp.pad(x_in, ((0, N_pad - N), (0, 0)))

    scale_x = tile_n >= D          # apply the row norm on the narrower side
    kernel = functools.partial(_normed_linear_kernel, scale_x=scale_x)
    grid = (num_i, num_j)
    x_spec = pl.BlockSpec((tile_m, D), lambda i, j: (i, 0))
    o_spec = pl.BlockSpec((tile_m, tile_n), lambda i, j: (i, j))
    out_shape = jax.ShapeDtypeStruct((N_pad, C_pad), jnp.float32)
    params = pltpu.CompilerParams(
        dimension_semantics=("parallel", "parallel"),
        vmem_limit_bytes=budget,
    )

    def run(single_buffer_weight: bool):
        if single_buffer_weight:
            # Constant index_map -> nothing to pipeline: single-buffer it and
            # spend the freed VMEM on bigger row tiles.
            w_spec = pl.BlockSpec((D, tile_n), lambda i, j: (0, j),
                                  pipeline_mode=pl.Buffered(1))
        else:
            w_spec = pl.BlockSpec((D, tile_n), lambda i, j: (0, j))
        return pl.pallas_call(
            kernel,
            out_shape=out_shape,
            grid=grid,
            in_specs=[x_spec, w_spec],
            out_specs=o_spec,
            compiler_params=params,
        )(x_in, wn)

    if single_w:
        try:
            out_padded = run(True)
        except Exception:   # defensive: fall back to default double buffering
            out_padded = run(False)
    else:
        out_padded = run(False)
    return out_padded[:N, :C]


# ----------------------------------------------------------------------------
# ResClassifier forward glue (training path, use_norm=True, no dropout).
# The torch.cat of the 3 channel chunks along the batch dim is replaced by a
# free contiguous reshape to (3B, c) in (sample-major, chunk) order; the final
# 3-way split undoes the permutation, so the returned list is numerically
# identical to the PyTorch module's output.
# TODO(synk): dropout and the eval-mode tau-normalized nn.Linear branch are
# plain elementwise/layout JAX and are not given dedicated kernels here.
# ----------------------------------------------------------------------------
def res_classifier_forward(feats, weights, *, s: float = 1.0,
                           use_bf16_matmul: bool = True):
    B = feats[0].shape[0]
    outs = []
    for x, w in zip(feats, weights):
        flat = x.reshape(B, -1)
        c = flat.shape[1] // 3
        xr = flat[:, :3 * c].reshape(B * 3, c)        # row b*3+k = chunk k of b
        outs.append(normed_linear(xr, w, use_bf16_matmul=use_bf16_matmul) * s)
    logits = jnp.stack(outs, axis=1).mean(axis=1).reshape(B, 3, -1)
    return [logits[:, 0, :], logits[:, 1, :], logits[:, 2, :]]


# ----------------------------------------------------------------------------
# Pure-jnp references + init helper.
# ----------------------------------------------------------------------------
def normed_linear_ref(x, w):
    x = x.astype(jnp.float32)
    w = w.astype(jnp.float32)
    xn = x / jnp.maximum(jnp.linalg.norm(x, axis=1, keepdims=True), _EPS)
    wn = w / jnp.maximum(jnp.linalg.norm(w, axis=0, keepdims=True), _EPS)
    return xn @ wn


def res_classifier_forward_ref(feats, weights, *, s=1.0):
    # Literal transcription of the PyTorch forward (training path, use_norm).
    outs = []
    for x, w in zip(feats, weights):
        flat = x.reshape(x.shape[0], -1)
        c = flat.shape[1] // 3
        out = jnp.concatenate(
            [flat[:, :c], flat[:, c:2 * c], flat[:, 2 * c:3 * c]], axis=0)
        outs.append(normed_linear_ref(out, w) * s)
    logits = jnp.stack(outs, axis=1).mean(axis=1)
    n = logits.shape[0] // 3
    return [logits[:n], logits[n:2 * n], logits[2 * n:]]


def init_normed_linear_weight(key, in_features, out_features):
    """uniform_(-1,1).renorm_(2, 1, 1e-5).mul_(1e5): columns end up ~unit-norm."""
    w = jax.random.uniform(key, (in_features, out_features),
                           minval=-1.0, maxval=1.0, dtype=jnp.float32)
    maxnorm = 1e-5
    col_norms = jnp.linalg.norm(w, axis=0, keepdims=True)
    scale = jnp.where(col_norms > maxnorm, maxnorm / (col_norms + 1e-7), 1.0)
    return w * scale * 1e5


if __name__ == "__main__":
    key = jax.random.PRNGKey(0)
    kx, kw, k1, k2, k3, k4, k5, kf = jax.random.split(key, 8)

    # --- NormedLinear kernel: small canonical shape, incl. a zero row -------
    N, D, C = 8, 32, 16
    x = jax.random.normal(kx, (N, D), dtype=jnp.float32)
    x = x.at[3].set(0.0)                 # zero-row edge case for the eps clamp
    w = init_normed_linear_weight(kw, D, C)
    ref = normed_linear_ref(x, w)

    out_f32 = jax.block_until_ready(normed_linear(x, w, use_bf16_matmul=False))
    assert out_f32.shape == (N, C)
    assert jnp.allclose(out_f32, ref, atol=1e-5, rtol=1e-5), "f32 mismatch"

    out_bf16 = jax.block_until_ready(normed_linear(x, w, use_bf16_matmul=True))
    assert jnp.allclose(out_bf16, ref, atol=2e-2, rtol=0.0), "bf16 mismatch"

    # --- Row tiling + padding + epilogue-side row scaling (D > tile_n) ------
    N2, D2, C2 = 37, 256, 100
    x2 = jax.random.normal(k1, (N2, D2), dtype=jnp.float32)
    w2 = init_normed_linear_weight(k2, D2, C2)
    out2 = jax.block_until_ready(normed_linear(x2, w2, use_bf16_matmul=False))
    assert jnp.allclose(out2, normed_linear_ref(x2, w2), atol=1e-4, rtol=1e-4), \
        "padded-shape mismatch"

    # --- Forced class-dim tiling (num_j > 1, double-buffered weight) --------
    N3, D3, C3 = 16, 64, 200
    x3 = jax.random.normal(k4, (N3, D3), dtype=jnp.float32)
    w3 = init_normed_linear_weight(k5, D3, C3)
    out3 = jax.block_until_ready(
        normed_linear(x3, w3, use_bf16_matmul=False, tile_n=128))
    assert jnp.allclose(out3, normed_linear_ref(x3, w3), atol=1e-4, rtol=1e-4), \
        "class-tiled mismatch"

    # --- ResClassifier-style forward: 3 experts, NormedLinear heads ---------
    batch, ch, hw, num_experts, num_classes = 2, 12, 4, 3, 10
    feats = [jax.random.normal(jax.random.fold_in(kf, i),
                               (batch, ch, hw, hw), dtype=jnp.float32)
             for i in range(num_experts)]
    c_in = (ch * hw * hw) // 3
    wkeys = jax.random.split(k3, num_experts)
    ws = [init_normed_linear_weight(wkeys[i], c_in, num_classes)
          for i in range(num_experts)]

    final = jax.block_until_ready(
        res_classifier_forward(feats, ws, s=1.0, use_bf16_matmul=False))
    final_ref = res_classifier_forward_ref(feats, ws, s=1.0)
    assert len(final) == 3 and final[0].shape == (batch, num_classes)
    for got, want in zip(final, final_ref):
        assert jnp.allclose(got, want, atol=1e-5, rtol=1e-5), "classifier mismatch"

    print("KERNEL_OK")
</pallas_src>

<mosaic_0001>
module attributes {stable_mosaic.version = 11 : i64} {
  func.func @_normed_linear_kernel(%arg0: i32, %arg1: i32, %arg2: memref<8x32xf32, #tpu.memory_space<vmem>>, %arg3: memref<32x128xf32, #tpu.memory_space<vmem>>, %arg4: memref<8x128xf32, #tpu.memory_space<vmem>>) attributes {dimension_semantics = [#tpu.dimension_semantics<parallel>, #tpu.dimension_semantics<parallel>], iteration_bounds = array<i64: 1, 1>, scalar_prefetch = 0 : i64, scratch_operands = 0 : i64, tpu.core_type = #tpu.core_type<tc>, window_params = [{transform_indices = @transform_0, window_bounds = array<i64: 8, 32>}, {pipeline_mode = #tpu.pipeline_mode<synchronous>, transform_indices = @transform_1, window_bounds = array<i64: 32, 128>}, {transform_indices = @transform_2, window_bounds = array<i64: 8, 128>}]} {
    %c0 = arith.constant 0 : index
    %c0_0 = arith.constant 0 : index
    %0 = vector.load %arg2[%c0, %c0_0] : memref<8x32xf32, #tpu.memory_space<vmem>>, vector<8x32xf32>
    %1 = arith.mulf %0, %0 : vector<8x32xf32>
    %cst = arith.constant dense<0.000000e+00> : vector<8xf32>
    %2 = vector.multi_reduction <add>, %1, %cst [1] : vector<8x32xf32> to vector<8xf32>
    %3 = vector.shape_cast %2 : vector<8xf32> to vector<8x1xf32>
    %cst_1 = arith.constant 1.000000e-24 : f32
    %4 = vector.broadcast %cst_1 : f32 to vector<8x1xf32>
    %5 = arith.maximumf %3, %4 : vector<8x1xf32>
    %6 = math.rsqrt %5 : vector<8x1xf32>
    %7 = vector.broadcast %6 : vector<8x1xf32> to vector<8x32xf32>
    %8 = arith.mulf %0, %7 : vector<8x32xf32>
    %c0_2 = arith.constant 0 : index
    %c0_3 = arith.constant 0 : index
    %9 = vector.load %arg3[%c0_2, %c0_3] : memref<32x128xf32, #tpu.memory_space<vmem>>, vector<32x128xf32>
    %cst_4 = arith.constant dense<0.000000e+00> : vector<8x128xf32>
    %10 = tpu.matmul %8, %9, %cst_4 {dimension_numbers = #tpu.dot_dimension_numbers<[1], [0], [0], [1], [0, 0, 1, 1], [], []>} : vector<8x32xf32>, vector<32x128xf32>, vector<8x128xf32> -> vector<8x128xf32>
    %c0_5 = arith.constant 0 : index
    %c0_6 = arith.constant 0 : index
    %11 = vector.load %arg4[%c0_5, %c0_6] : memref<8x128xf32, #tpu.memory_space<vmem>>, vector<8x128xf32>
    tpu.vector_store %arg4[%c0_5, %c0_6], %10 {strides = array<i32>} : memref<8x128xf32, #tpu.memory_space<vmem>>, vector<8x128xf32>,
    return
  }
  func.func @transform_0(%arg0: i32, %arg1: i32) -> (i32, i32) {
    %c0_i32 = arith.constant 0 : i32
    %c0_i32_0 = arith.constant 0 : i32
    return %arg0, %c0_i32 : i32, i32
  }
  func.func @transform_1(%arg0: i32, %arg1: i32) -> (i32, i32) {
    %c0_i32 = arith.constant 0 : i32
    %c0_i32_0 = arith.constant 0 : i32
    return %c0_i32, %arg1 : i32, i32
  }
  func.func @transform_2(%arg0: i32, %arg1: i32) -> (i32, i32) {
    %c0_i32 = arith.constant 0 : i32
    return %arg0, %arg1 : i32, i32
  }
}

module attributes {stable_mosaic.version = 11 : i64} {
  func.func @_normed_linear_kernel(%arg0: i32, %arg1: i32, %arg2: memref<8x32xf32, #tpu.memory_space<vmem>>, %arg3: memref<32x128xf32, #tpu.memory_space<vmem>>, %arg4: memref<8x128xf32, #tpu.memory_space<vmem>>) attributes {dimension_semantics = [#tpu.dimension_semantics<parallel>, #tpu.dimension_semantics<parallel>], iteration_bounds = array<i64: 1, 1>, scalar_prefetch = 0 : i64, scratch_operands = 0 : i64, tpu.core_type = #tpu.core_type<tc>, window_params = [{transform_indices = @transform_0, window_bounds = array<i64: 8, 32>}, {transform_indices = @transform_1, window_bounds = array<i64: 32, 128>}, {transform_indices = @transform_2, window_bounds = array<i64: 8, 128>}]} {
    %c0 = arith.constant 0 : index
    %c0_0 = arith.constant 0 : index
    %0 = vector.load %arg2[%c0, %c0_0] : memref<8x32xf32, #tpu.memory_space<vmem>>, vector<8x32xf32>
    %1 = arith.mulf %0, %0 : vector<8x32xf32>
    %cst = arith.constant dense<0.000000e+00> : vector<8xf32>
    %2 = vector.multi_reduction <add>, %1, %cst [1] : vector<8x32xf32> to vector<8xf32>
    %3 = vector.shape_cast %2 : vector<8xf32> to vector<8x1xf32>
    %cst_1 = arith.constant 1.000000e-24 : f32
    %4 = vector.broadcast %cst_1 : f32 to vector<8x1xf32>
    %5 = arith.maximumf %3, %4 : vector<8x1xf32>
    %6 = math.rsqrt %5 : vector<8x1xf32>
    %7 = vector.broadcast %6 : vector<8x1xf32> to vector<8x32xf32>
    %8 = arith.mulf %0, %7 : vector<8x32xf32>
    %c0_2 = arith.constant 0 : index
    %c0_3 = arith.constant 0 : index
    %9 = vector.load %arg3[%c0_2, %c0_3] : memref<32x128xf32, #tpu.memory_space<vmem>>, vector<32x128xf32>
    %cst_4 = arith.constant dense<0.000000e+00> : vector<8x128xf32>
    %10 = tpu.matmul %8, %9, %cst_4 {dimension_numbers = #tpu.dot_dimension_numbers<[1], [0], [0], [1], [0, 0, 1, 1], [], []>} : vector<8x32xf32>, vector<32x128xf32>, vector<8x128xf32> -> vector<8x128xf32>
    %c0_5 = arith.constant 0 : index
    %c0_6 = arith.constant 0 : index
    %11 = vector.load %arg4[%c0_5, %c0_6] : memref<8x128xf32, #tpu.memory_space<vmem>>, vector<8x128xf32>
    tpu.vector_store %arg4[%c0_5, %c0_6], %10 {strides = array<i32>} : memref<8x128xf32, #tpu.memory_space<vmem>>, vector<8x128xf32>,
    return
  }
  func.func @transform_0(%arg0: i32, %arg1: i32) -> (i32, i32) {
    %c0_i32 = arith.constant 0 : i32
    %c0_i32_0 = arith.constant 0 : i32
    return %arg0, %c0_i32 : i32, i32
  }
  func.func @transform_1(%arg0: i32, %arg1: i32) -> (i32, i32) {
    %c0_i32 = arith.constant 0 : i32
    %c0_i32_0 = arith.constant 0 : i32
    return %c0_i32, %arg1 : i32, i32
  }
  func.func @transform_2(%arg0: i32, %arg1: i32) -> (i32, i32) {
    %c0_i32 = arith.constant 0 : i32
    return %arg0, %arg1 : i32, i32
  }
}

</mosaic_0001>

<llo_original>
// kernel: tpu_custom_call.1
$region0: #{tpu_custom_call.1}
  #allocation0 [shape = 'u32[]', space=smem, size = 0x4, offset = 0x4, fixed_abs, tag = 'smem constant byte address 0x4 - core index']
  #allocation1 [shape = 'u32[144,128]{1,0:T(1,128)}', space=vmem, size = 0x12000, scoped, tag = 'internal scratch']
  %s0 = inlined_call_operand.hbm [shape: f32[8,32], index: 0, kind: input, shape index: {}]
  %s1 = inlined_call_operand.hbm [shape: f32[32,128], index: 1, kind: input, shape index: {}]
  %s2 = inlined_call_operand.hbm [shape: f32[8,128], index: 2, kind: output, shape index: {}]
  %s3 = sld [smem:[#allocation0]]
  $region26: #{tpu_custom_call.1} parent=0
    _
  %s5 = ssub.s32 1, %s3
  %s6 = scalar_select 0, %s5, %s3
  $region1: #{tpu_custom_call.1} parent=0
    #allocation2 [shape = 'u8[4096]{0}', space=vmem, size = 0x1000, scoped, tag = 'input window, operand 0, single buffered']
    #allocation3 [shape = 's32[1]{0}', space=sflag, size = 0x4, scoped, tag = 'scoped memory for tpu_custom_call.1']
    #allocation4 [shape = 's32[1]{0}', space=sflag, size = 0x4, scoped, tag = 'scoped memory for tpu_custom_call.1']
    #allocation5 [shape = 'u8[16384]{0}', space=vmem, size = 0x4000, scoped, tag = 'input window, operand 1, single buffered']
    #allocation6 [shape = 's32[1]{0}', space=sflag, size = 0x4, scoped, tag = 'scoped memory for tpu_custom_call.1']
    #allocation7 [shape = 'u8[4096]{0}', space=vmem, size = 0x1000, scoped, tag = 'output window, operand 0, single buffered']
    %7 = vsyncpa [#allocation3], 0
    %8 = vsyncpa [#allocation6], 0
    %9 = vsyncpa [#allocation4], 0
    // Predicated region
    $region2: #{tpu_custom_call.1} parent=1 // pred_check
      _
    $region3: #{tpu_custom_call.1} parent=1 // pred_check_branch
      %11 = sbr.rel (0) target = $region5
    $region4: #{tpu_custom_call.1} parent=1 // pred_region
      %s13 = ssub.s32 128, 128
      %14 = vsyncadd [#allocation3], %s13
      %s16 = sshll.u32 [#allocation2], 4
      %s17 = int_to_ptr.vmem [resolvable:$true] %s16
      %19 = dma.hbm_to_vmem [thread:$0]  %s0, 128, %s17, [#allocation3]
    $region5: #{tpu_custom_call.1} parent=1 // pred_fallthru
      _
    // Predicated region
    $region6: #{tpu_custom_call.1} parent=1 // pred_check
      _
    $region7: #{tpu_custom_call.1} parent=1 // pred_check_branch
      %21 = sbr.rel (0) target = $region9
    $region8: #{tpu_custom_call.1} parent=1 // pred_region
      %s23 = ssub.s32 512, 512
      %24 = vsyncadd [#allocation6], %s23
      %s25 = sshll.u32 [#allocation5], 4
      %s26 = int_to_ptr.vmem [resolvable:$true] %s25
      %31 = dma.hbm_to_vmem [thread:$0]  %s1, 512, %s26, [#allocation6], 128, 128, 8
    $region9: #{tpu_custom_call.1} parent=1 // pred_fallthru
      _
    // Predicated region
    $region10: #{tpu_custom_call.1} parent=1 // pred_check
      _
    $region11: #{tpu_custom_call.1} parent=1 // pred_check_branch
      %33 = sbr.rel (0) target = $region13
    $region12: #{tpu_custom_call.1} parent=1 // pred_region
      %34 = dma.done [#allocation3], 128
    $region13: #{tpu_custom_call.1} parent=1 // pred_fallthru
      _
    // Predicated region
    $region14: #{tpu_custom_call.1} parent=1 // pred_check
      _
    $region15: #{tpu_custom_call.1} parent=1 // pred_check_branch
      %36 = sbr.rel (0) target = $region17
    $region16: #{tpu_custom_call.1} parent=1 // pred_region
      %37 = dma.done [#allocation6], 512
    $region17: #{tpu_custom_call.1} parent=1 // pred_fallthru
      _
    %v38 = vld [vmem:[#allocation2] sm:$0xff]
    %v39 = vmul.f32 %v38, %v38
    %vm40 = vcmask 261120
    %v41 = vsel %vm40, %v39, 0.0
    %42 = vadd.xlane.f32.xlu0 %v41
    %v43 = vpop.xlane.xlu0 %42
    %v44 = vmax.f32 %v43, 1e-24
    %v45 = vrsqrt.pop %v44
    %v46 = vmul.f32 %v38, %v45
    %v47 = vld [vmem:[#allocation5] sm:$0xff]
    %v48 = vld [vmem:[#allocation5 + $0x8] sm:$0xff]
    %v49 = vld [vmem:[#allocation5 + $0x10] sm:$0xff]
    %v50 = vld [vmem:[#allocation5 + $0x18] sm:$0xff]
    %v52 = vsel %vm40, %v46, 0
    %54 = vmatprep.subr.mxu0 0.0
    %55 = vmatpush1.msra.mxu0 %v47
    %56 = vmatprep.subr.mxu0 0.0
    %57 = vmatpush1.msra.mxu0 %v48
    %58 = vmatprep.subr.mxu0 0.0
    %59 = vmatpush1.msra.mxu0 %v49
    %60 = vmatprep.subr.mxu0 0.0
    %61 = vmatpush1.msra.mxu0 %v50
    %62 = vmatprep.subr.mxu0 0.0
    %63 = vmatpush1.msra.mxu0 0.0
    %64 = vmatprep.subr.mxu0 0.0
    %65 = vmatpush1.msra.mxu0 0.0
    %66 = vmatprep.subr.mxu0 0.0
    %67 = vmatpush1.msra.mxu0 0.0
    %68 = vmatprep.subr.mxu0 0.0
    %69 = vmatpush1.msra.mxu0 0.0
    %70 = vmatprep.subr.mxu0 0.0
    %71 = vmatpush1.msra.mxu0 0.0
    %72 = vmatprep.subr.mxu0 0.0
    %73 = vmatpush1.msra.mxu0 0.0
    %74 = vmatprep.subr.mxu0 0.0
    %75 = vmatpush1.msra.mxu0 0.0
    %76 = vmatprep.subr.mxu0 0.0
    %77 = vmatpush1.msra.mxu0 0.0
    %78 = vmatprep.subr.mxu0 0.0
    %79 = vmatpush1.msra.mxu0 0.0
    %80 = vmatprep.subr.mxu0 0.0
    %81 = vmatpush1.msra.mxu0 0.0
    %82 = vmatprep.subr.mxu0 0.0
    %83 = vmatpush1.msra.mxu0 0.0
    %84 = vmatprep.subr.mxu0 0.0
    %85 = vmatpush1.msra.mxu0 0.0
    %86 = vmatprep.subr.mxu0 0.0
    %87 = vmatpush1.msra.mxu0 0.0
    %88 = vmatprep.subr.mxu0 0.0
    %89 = vmatpush1.msra.mxu0 0.0
    %90 = vmatprep.subr.mxu0 0.0
    %91 = vmatpush1.msra.mxu0 0.0
    %92 = vmatprep.subr.mxu0 0.0
    %93 = vmatpush1.msra.mxu0 0.0
    %94 = vmatprep.subr.mxu0 0.0
    %95 = vmatpush1.msra.mxu0 0.0
    %96 = vmatprep.subr.mxu0 0.0
    %97 = vmatpush1.msra.mxu0 0.0
    %98 = vmatprep.subr.mxu0 0.0
    %99 = vmatpush1.msra.mxu0 0.0
    %100 = vmatprep.subr.mxu0 0.0
    %101 = vmatpush1.msra.mxu0 0.0
    %102 = vmatprep.subr.mxu0 0.0
    %103 = vmatpush1.msra.mxu0 0.0
    %104 = vmatprep.subr.mxu0 0.0
    %105 = vmatpush1.msra.mxu0 0.0
    %106 = vmatprep.subr.mxu0 0.0
    %107 = vmatpush1.msra.mxu0 0.0
    %108 = vmatprep.subr.mxu0 0.0
    %109 = vmatpush1.msra.mxu0 0.0
    %110 = vmatprep.subr.mxu0 0.0
    %111 = vmatpush1.msra.mxu0 0.0
    %112 = vmatprep.subr.mxu0 0.0
    %113 = vmatpush1.msra.mxu0 0.0
    %114 = vmatprep.subr.mxu0 0.0
    %115 = vmatpush1.msra.mxu0 0.0
    %116 = vmatprep.subr.mxu0 0.0
    %117 = vmatpush1.msra.mxu0 0.0
    %118 = vmatprep.mubr.f32.mxu0 0.0
    %119 = vmatmul.mubr.f32.gmra.mrb[0].mxu0 %v52
    %v120 = vpop.f32.mrb[0].mxu0
    %v121 = vadd.f32 0.0, %v120
    %v122 = vpop.f32.mrb[0].mxu0
    %123 = vdwg.mxu0
    %124 = vst [vmem:[#allocation7] sm:$0xff] %v121
    // Predicated region
    $region18: #{tpu_custom_call.1} parent=1 // pred_check
      _
    $region19: #{tpu_custom_call.1} parent=1 // pred_check_branch
      %126 = sbr.rel (0) target = $region21
    $region20: #{tpu_custom_call.1} parent=1 // pred_region
      %s128 = ssub.s32 128, 128
      %129 = vsyncadd [#allocation4], %s128
      %s131 = sshll.u32 [#allocation7], 4
      %s132 = int_to_ptr.vmem [resolvable:$true] %s131
      %134 = dma.vmem_to_hbm [thread:$0]  %s132, 128, %s2, [#allocation4]
    $region21: #{tpu_custom_call.1} parent=1 // pred_fallthru
      _
    // Predicated region
    $region22: #{tpu_custom_call.1} parent=1 // pred_check
      _
    $region23: #{tpu_custom_call.1} parent=1 // pred_check_branch
      %136 = sbr.rel (0) target = $region25
    $region24: #{tpu_custom_call.1} parent=1 // pred_region
      %137 = dma.done [#allocation4], 128
    $region25: #{tpu_custom_call.1} parent=1 // pred_fallthru
      _
    %138 = vsyncpa [#allocation3], 1
    %139 = vsyncpa [#allocation6], 1
    %140 = vsyncpa [#allocation4], 1

// kernel: tpu_custom_call.1
$region0: #{tpu_custom_call.1}
  #allocation0 [shape = 'u32[]', space=smem, size = 0x4, offset = 0x4, fixed_abs, tag = 'smem constant byte address 0x4 - core index']
  #allocation1 [shape = 'u32[144,128]{1,0:T(1,128)}', space=vmem, size = 0x12000, scoped, tag = 'internal scratch']
  %s0 = inlined_call_operand.hbm [shape: f32[8,32], index: 0, kind: input, shape index: {}]
  %s1 = inlined_call_operand.hbm [shape: f32[32,128], index: 1, kind: input, shape index: {}]
  %s2 = inlined_call_operand.hbm [shape: f32[8,128], index: 2, kind: output, shape index: {}]
  %s3 = sld [smem:[#allocation0]]
  $region26: #{tpu_custom_call.1} parent=0
    _
  %s5 = ssub.s32 1, %s3
  %s6 = scalar_select 0, %s5, %s3
  $region1: #{tpu_custom_call.1} parent=0
    #allocation2 [shape = 'u8[4096]{0}', space=vmem, size = 0x1000, scoped, tag = 'input window, operand 0, single buffered']
    #allocation3 [shape = 's32[1]{0}', space=sflag, size = 0x4, scoped, tag = 'scoped memory for tpu_custom_call.1']
    #allocation4 [shape = 's32[1]{0}', space=sflag, size = 0x4, scoped, tag = 'scoped memory for tpu_custom_call.1']
    #allocation5 [shape = 'u8[16384]{0}', space=vmem, size = 0x4000, scoped, tag = 'input window, operand 1, single buffered']
    #allocation6 [shape = 's32[1]{0}', space=sflag, size = 0x4, scoped, tag = 'scoped memory for tpu_custom_call.1']
    #allocation7 [shape = 'u8[4096]{0}', space=vmem, size = 0x1000, scoped, tag = 'output window, operand 0, single buffered']
    %7 = vsyncpa [#allocation3], 0
    %8 = vsyncpa [#allocation6], 0
    %9 = vsyncpa [#allocation4], 0
    // Predicated region
    $region2: #{tpu_custom_call.1} parent=1 // pred_check
      _
    $region3: #{tpu_custom_call.1} parent=1 // pred_check_branch
      %11 = sbr.rel (0) target = $region5
    $region4: #{tpu_custom_call.1} parent=1 // pred_region
      %s13 = ssub.s32 128, 128
      %14 = vsyncadd [#allocation3], %s13
      %s16 = sshll.u32 [#allocation2], 4
      %s17 = int_to_ptr.vmem [resolvable:$true] %s16
      %19 = dma.hbm_to_vmem [thread:$0]  %s0, 128, %s17, [#allocation3]
    $region5: #{tpu_custom_call.1} parent=1 // pred_fallthru
      _
    // Predicated region
    $region6: #{tpu_custom_call.1} parent=1 // pred_check
      _
    $region7: #{tpu_custom_call.1} parent=1 // pred_check_branch
      %21 = sbr.rel (0) target = $region9
    $region8: #{tpu_custom_call.1} parent=1 // pred_region
      %s23 = ssub.s32 512, 512
      %24 = vsyncadd [#allocation6], %s23
      %s25 = sshll.u32 [#allocation5], 4
      %s26 = int_to_ptr.vmem [resolvable:$true] %s25
      %31 = dma.hbm_to_vmem [thread:$0]  %s1, 512, %s26, [#allocation6], 128, 128, 8
    $region9: #{tpu_custom_call.1} parent=1 // pred_fallthru
      _
    // Predicated region
    $region10: #{tpu_custom_call.1} parent=1 // pred_check
      _
    $region11: #{tpu_custom_call.1} parent=1 // pred_check_branch
      %33 = sbr.rel (0) target = $region13
    $region12: #{tpu_custom_call.1} parent=1 // pred_region
      %34 = dma.done [#allocation3], 128
    $region13: #{tpu_custom_call.1} parent=1 // pred_fallthru
      _
    // Predicated region
    $region14: #{tpu_custom_call.1} parent=1 // pred_check
      _
    $region15: #{tpu_custom_call.1} parent=1 // pred_check_branch
      %36 = sbr.rel (0) target = $region17
    $region16: #{tpu_custom_call.1} parent=1 // pred_region
      %37 = dma.done [#allocation6], 512
    $region17: #{tpu_custom_call.1} parent=1 // pred_fallthru
      _
    %v38 = vld [vmem:[#allocation2] sm:$0xff]
    %v39 = vmul.f32 %v38, %v38
    %vm40 = vcmask 261120
    %v41 = vsel %vm40, %v39, 0.0
    %42 = vadd.xlane.f32.xlu0 %v41
    %v43 = vpop.xlane.xlu0 %42
    %v44 = vmax.f32 %v43, 1e-24
    %v45 = vrsqrt.pop %v44
    %v46 = vmul.f32 %v38, %v45
    %v47 = vld [vmem:[#allocation5] sm:$0xff]
    %v48 = vld [vmem:[#allocation5 + $0x8] sm:$0xff]
    %v49 = vld [vmem:[#allocation5 + $0x10] sm:$0xff]
    %v50 = vld [vmem:[#allocation5 + $0x18] sm:$0xff]
    %v52 = vsel %vm40, %v46, 0
    %54 = vmatprep.subr.mxu0 0.0
    %55 = vmatpush1.msra.mxu0 %v47
    %56 = vmatprep.subr.mxu0 0.0
    %57 = vmatpush1.msra.mxu0 %v48
    %58 = vmatprep.subr.mxu0 0.0
    %59 = vmatpush1.msra.mxu0 %v49
    %60 = vmatprep.subr.mxu0 0.0
    %61 = vmatpush1.msra.mxu0 %v50
    %62 = vmatprep.subr.mxu0 0.0
    %63 = vmatpush1.msra.mxu0 0.0
    %64 = vmatprep.subr.mxu0 0.0
    %65 = vmatpush1.msra.mxu0 0.0
    %66 = vmatprep.subr.mxu0 0.0
    %67 = vmatpush1.msra.mxu0 0.0
    %68 = vmatprep.subr.mxu0 0.0
    %69 = vmatpush1.msra.mxu0 0.0
    %70 = vmatprep.subr.mxu0 0.0
    %71 = vmatpush1.msra.mxu0 0.0
    %72 = vmatprep.subr.mxu0 0.0
    %73 = vmatpush1.msra.mxu0 0.0
    %74 = vmatprep.subr.mxu0 0.0
    %75 = vmatpush1.msra.mxu0 0.0
    %76 = vmatprep.subr.mxu0 0.0
    %77 = vmatpush1.msra.mxu0 0.0
    %78 = vmatprep.subr.mxu0 0.0
    %79 = vmatpush1.msra.mxu0 0.0
    %80 = vmatprep.subr.mxu0 0.0
    %81 = vmatpush1.msra.mxu0 0.0
    %82 = vmatprep.subr.mxu0 0.0
    %83 = vmatpush1.msra.mxu0 0.0
    %84 = vmatprep.subr.mxu0 0.0
    %85 = vmatpush1.msra.mxu0 0.0
    %86 = vmatprep.subr.mxu0 0.0
    %87 = vmatpush1.msra.mxu0 0.0
    %88 = vmatprep.subr.mxu0 0.0
    %89 = vmatpush1.msra.mxu0 0.0
    %90 = vmatprep.subr.mxu0 0.0
    %91 = vmatpush1.msra.mxu0 0.0
    %92 = vmatprep.subr.mxu0 0.0
    %93 = vmatpush1.msra.mxu0 0.0
    %94 = vmatprep.subr.mxu0 0.0
    %95 = vmatpush1.msra.mxu0 0.0
    %96 = vmatprep.subr.mxu0 0.0
    %97 = vmatpush1.msra.mxu0 0.0
    %98 = vmatprep.subr.mxu0 0.0
    %99 = vmatpush1.msra.mxu0 0.0
    %100 = vmatprep.subr.mxu0 0.0
    %101 = vmatpush1.msra.mxu0 0.0
    %102 = vmatprep.subr.mxu0 0.0
    %103 = vmatpush1.msra.mxu0 0.0
    %104 = vmatprep.subr.mxu0 0.0
    %105 = vmatpush1.msra.mxu0 0.0
    %106 = vmatprep.subr.mxu0 0.0
    %107 = vmatpush1.msra.mxu0 0.0
    %108 = vmatprep.subr.mxu0 0.0
    %109 = vmatpush1.msra.mxu0 0.0
    %110 = vmatprep.subr.mxu0 0.0
    %111 = vmatpush1.msra.mxu0 0.0
    %112 = vmatprep.subr.mxu0 0.0
    %113 = vmatpush1.msra.mxu0 0.0
    %114 = vmatprep.subr.mxu0 0.0
    %115 = vmatpush1.msra.mxu0 0.0
    %116 = vmatprep.subr.mxu0 0.0
    %117 = vmatpush1.msra.mxu0 0.0
    %118 = vmatprep.mubr.f32.mxu0 0.0
    %119 = vmatmul.mubr.f32.gmra.mrb[0].mxu0 %v52
    %v120 = vpop.f32.mrb[0].mxu0
    %v121 = vadd.f32 0.0, %v120
    %v122 = vpop.f32.mrb[0].mxu0
    %123 = vdwg.mxu0
    %124 = vst [vmem:[#allocation7] sm:$0xff] %v121
    // Predicated region
    $region18: #{tpu_custom_call.1} parent=1 // pred_check
      _
    $region19: #{tpu_custom_call.1} parent=1 // pred_check_branch
      %126 = sbr.rel (0) target = $region21
    $region20: #{tpu_custom_call.1} parent=1 // pred_region
      %s128 = ssub.s32 128, 128
      %129 = vsyncadd [#allocation4], %s128
      %s131 = sshll.u32 [#allocation7], 4
      %s132 = int_to_ptr.vmem [resolvable:$true] %s131
      %134 = dma.vmem_to_hbm [thread:$0]  %s132, 128, %s2, [#allocation4]
    $region21: #{tpu_custom_call.1} parent=1 // pred_fallthru
      _
    // Predicated region
    $region22: #{tpu_custom_call.1} parent=1 // pred_check
      _
    $region23: #{tpu_custom_call.1} parent=1 // pred_check_branch
      %136 = sbr.rel (0) target = $region25
    $region24: #{tpu_custom_call.1} parent=1 // pred_region
      %137 = dma.done [#allocation4], 128
    $region25: #{tpu_custom_call.1} parent=1 // pred_fallthru
      _
    %138 = vsyncpa [#allocation3], 1
    %139 = vsyncpa [#allocation6], 1
    %140 = vsyncpa [#allocation4], 1

</llo_original>
